<compile_context>
chip_gen: v7x
topology: tpu7x:2x2x1
jax: 0.10.0
libtpu: 0.0.40
codegen_flags: <defaults>
</compile_context>

<pallas_src>
import functools

import jax
import jax.numpy as jnp
from jax.experimental import pallas as pl
from jax.experimental.pallas import tpu as pltpu

LANE = 128


def _linear_add_relu_kernel(x_ref, w_ref, s_ref, o_ref, *, chunk):
    # x_ref: (tb, C, 128) f32 VMEM; w_ref: (1, C, 128) f32 VMEM (resident);
    # s_ref: (1,) f32 SMEM holding (bias + other); o_ref: (tb, 1).
    tb, C, _ = x_ref.shape
    s = s_ref[0]

    acc = jnp.zeros((tb, 1), jnp.float32)
    # Chunked two-stage reduce: lane (XLU) reduce per sublane-chunk, then
    # accumulate over chunks -> live vregs stay small even for large tb.
    for g in range(C // chunk):
        xg = x_ref[:, g * chunk:(g + 1) * chunk, :]        # (tb, chunk, 128)
        wg = w_ref[:, g * chunk:(g + 1) * chunk, :]        # (1,  chunk, 128)
        p = jnp.sum(xg * wg, axis=-1)                      # (tb, chunk)
        acc = acc + jnp.sum(p, axis=-1, keepdims=True)     # (tb, 1)

    o_ref[...] = jnp.maximum(acc + s, 0.0).astype(o_ref.dtype)


def _pick_tb(B):
    # Whole batch in one step while it fits comfortably in VMEM on all
    # generations; larger batches get a tb that divides B, is a multiple of 8
    # (BlockSpec sublane rule) and yields grid >= 2 (v7x megacore sharding).
    if B <= 128:
        return B
    tb = 128
    while tb >= 8:
        if B % tb == 0:
            return tb
        tb -= 8
    return B  # no suitable divisor -> single step (still correct)


def linear_add_relu(x, w_row, scalar, *, tb=None):
    """x: (B, K) f32, w_row: (1, K) f32, scalar: (1,) f32 (= bias+other) -> (B, 1)."""
    B, K = x.shape
    assert K % LANE == 0, K
    C = K // LANE

    if tb is None:
        tb = _pick_tb(B)
    assert B % tb == 0, (B, tb)
    assert tb == B or tb % 8 == 0, tb  # (8,128) BlockSpec constraint on output tile

    chunk = 8 if C % 8 == 0 else C

    # Free row-major reshapes: pack K across sublanes so f32 vregs are full.
    x3 = x.reshape(B, C, LANE)
    w3 = w_row.reshape(1, C, LANE)

    grid = (B // tb,)
    flops = 2 * B * K
    bytes_accessed = (B * K + K + B + 1) * 4

    kernel = functools.partial(_linear_add_relu_kernel, chunk=chunk)

    return pl.pallas_call(
        kernel,
        out_shape=jax.ShapeDtypeStruct((B, 1), x.dtype),
        grid=grid,
        in_specs=[
            pl.BlockSpec((tb, C, LANE), lambda i: (i, 0, 0)),     # x rows tile
            # Weight row is grid-invariant (index_map -> (0,0,0)); if the
            # bundle dump ever shows it re-DMA'd per step, stage it once into
            # VMEM scratch under pl.when(program_id==0).
            pl.BlockSpec((1, C, LANE), lambda i: (0, 0, 0)),
            pl.BlockSpec(memory_space=pltpu.MemorySpace.SMEM),    # bias+other scalar
        ],
        out_specs=pl.BlockSpec((tb, 1), lambda i: (i, 0)),
        compiler_params=pltpu.CompilerParams(
            # Batch axis is fully independent -> shards across TCs on v7x
            # whenever grid >= 2.
            dimension_semantics=("parallel",),
        ),
        cost_estimate=pl.CostEstimate(
            flops=flops, transcendentals=0, bytes_accessed=bytes_accessed,
        ),
    )(x3, w3, scalar)


@jax.jit
def model_forward(x_nhwc, w, b, other):
    # Glue (fused under jit): flatten (B, 64, 64, 3) -> (B, 12288) row-major
    # like torch, and fold bias + other into one scalar.
    B = x_nhwc.shape[0]
    x_flat = x_nhwc.reshape(B, -1)
    w_row = w.reshape(1, -1)                      # torch Linear weight (1, K)
    scalar = (b.reshape(()) + other.reshape(())).reshape(1).astype(jnp.float32)
    return linear_add_relu(x_flat, w_row, scalar)


if __name__ == "__main__":
    key = jax.random.PRNGKey(0)
    k_x, k_w, k_b, k_o = jax.random.split(key, 4)

    B = 2
    K = 64 * 64 * 3  # 12288, fixed by Linear(64*64*3, 1)

    x1 = jax.random.normal(k_x, (B, 64, 64, 3), dtype=jnp.float32)
    bound = 1.0 / float(K) ** 0.5
    w = jax.random.uniform(k_w, (1, K), minval=-bound, maxval=bound, dtype=jnp.float32)
    b = jax.random.uniform(k_b, (1,), minval=-bound, maxval=bound, dtype=jnp.float32)
    other = jax.random.normal(k_o, (1,), dtype=jnp.float32)

    out = jax.block_until_ready(model_forward(x1, w, b, other))

    # Reference in plain JAX (same forward semantics as the torch module).
    ref = jnp.maximum(x1.reshape(B, -1) @ w.reshape(-1, 1) + b[0] + other[0], 0.0)
    assert out.shape == (B, 1), out.shape
    assert jnp.allclose(out, ref, atol=1e-3, rtol=1e-3), (out, ref)

    print("KERNEL_OK")
</pallas_src>

<mosaic_0001>
module attributes {stable_mosaic.version = 11 : i64} {
  func.func @_linear_add_relu_kernel(%arg0: i32, %arg1: memref<2x96x128xf32, #tpu.memory_space<vmem>>, %arg2: memref<1x96x128xf32, #tpu.memory_space<vmem>>, %arg3: memref<1xf32, #tpu.memory_space<smem>>, %arg4: memref<2x1xf32, #tpu.memory_space<vmem>>) attributes {dimension_semantics = [#tpu.dimension_semantics<parallel>], iteration_bounds = array<i64: 1>, scalar_prefetch = 0 : i64, scratch_operands = 0 : i64, tpu.core_type = #tpu.core_type<tc>, window_params = [{transform_indices = @transform_0, window_bounds = array<i64: 2, 96, 128>}, {pipeline_mode = #tpu.pipeline_mode<synchronous>, transform_indices = @transform_1, window_bounds = array<i64: 1, 96, 128>}, {transform_indices = @transform_2, window_bounds = array<i64: 1>}, {transform_indices = @transform_3, window_bounds = array<i64: 2, 1>}]} {
    %c0 = arith.constant 0 : index
    %0 = memref.load %arg3[%c0] : memref<1xf32, #tpu.memory_space<smem>>
    %cst = arith.constant 0.000000e+00 : f32
    %1 = vector.broadcast %cst : f32 to vector<2x1xf32>
    %c0_0 = arith.constant 0 : index
    %c0_1 = arith.constant 0 : index
    %c0_2 = arith.constant 0 : index
    %2 = vector.load %arg1[%c0_0, %c0_1, %c0_2] : memref<2x96x128xf32, #tpu.memory_space<vmem>>, vector<2x8x128xf32>
    %c0_3 = arith.constant 0 : index
    %c0_4 = arith.constant 0 : index
    %c0_5 = arith.constant 0 : index
    %3 = vector.load %arg2[%c0_3, %c0_4, %c0_5] : memref<1x96x128xf32, #tpu.memory_space<vmem>>, vector<1x8x128xf32>
    %4 = vector.broadcast %3 : vector<1x8x128xf32> to vector<2x8x128xf32>
    %5 = arith.mulf %2, %4 : vector<2x8x128xf32>
    %cst_6 = arith.constant dense<0.000000e+00> : vector<2x8xf32>
    %6 = vector.multi_reduction <add>, %5, %cst_6 [2] : vector<2x8x128xf32> to vector<2x8xf32>
    %cst_7 = arith.constant dense<0.000000e+00> : vector<2xf32>
    %7 = vector.multi_reduction <add>, %6, %cst_7 [1] : vector<2x8xf32> to vector<2xf32>
    %8 = vector.shape_cast %7 : vector<2xf32> to vector<2x1xf32>
    %9 = arith.addf %1, %8 : vector<2x1xf32>
    %c0_8 = arith.constant 0 : index
    %c8 = arith.constant 8 : index
    %c0_9 = arith.constant 0 : index
    %10 = vector.load %arg1[%c0_8, %c8, %c0_9] : memref<2x96x128xf32, #tpu.memory_space<vmem>>, vector<2x8x128xf32>
    %c0_10 = arith.constant 0 : index
    %c8_11 = arith.constant 8 : index
    %c0_12 = arith.constant 0 : index
    %11 = vector.load %arg2[%c0_10, %c8_11, %c0_12] : memref<1x96x128xf32, #tpu.memory_space<vmem>>, vector<1x8x128xf32>
    %12 = vector.broadcast %11 : vector<1x8x128xf32> to vector<2x8x128xf32>
    %13 = arith.mulf %10, %12 : vector<2x8x128xf32>
    %cst_13 = arith.constant dense<0.000000e+00> : vector<2x8xf32>
    %14 = vector.multi_reduction <add>, %13, %cst_13 [2] : vector<2x8x128xf32> to vector<2x8xf32>
    %cst_14 = arith.constant dense<0.000000e+00> : vector<2xf32>
    %15 = vector.multi_reduction <add>, %14, %cst_14 [1] : vector<2x8xf32> to vector<2xf32>
    %16 = vector.shape_cast %15 : vector<2xf32> to vector<2x1xf32>
    %17 = arith.addf %9, %16 : vector<2x1xf32>
    %c0_15 = arith.constant 0 : index
    %c16 = arith.constant 16 : index
    %c0_16 = arith.constant 0 : index
    %18 = vector.load %arg1[%c0_15, %c16, %c0_16] : memref<2x96x128xf32, #tpu.memory_space<vmem>>, vector<2x8x128xf32>
    %c0_17 = arith.constant 0 : index
    %c16_18 = arith.constant 16 : index
    %c0_19 = arith.constant 0 : index
    %19 = vector.load %arg2[%c0_17, %c16_18, %c0_19] : memref<1x96x128xf32, #tpu.memory_space<vmem>>, vector<1x8x128xf32>
    %20 = vector.broadcast %19 : vector<1x8x128xf32> to vector<2x8x128xf32>
    %21 = arith.mulf %18, %20 : vector<2x8x128xf32>
    %cst_20 = arith.constant dense<0.000000e+00> : vector<2x8xf32>
    %22 = vector.multi_reduction <add>, %21, %cst_20 [2] : vector<2x8x128xf32> to vector<2x8xf32>
    %cst_21 = arith.constant dense<0.000000e+00> : vector<2xf32>
    %23 = vector.multi_reduction <add>, %22, %cst_21 [1] : vector<2x8xf32> to vector<2xf32>
    %24 = vector.shape_cast %23 : vector<2xf32> to vector<2x1xf32>
    %25 = arith.addf %17, %24 : vector<2x1xf32>
    %c0_22 = arith.constant 0 : index
    %c24 = arith.constant 24 : index
    %c0_23 = arith.constant 0 : index
    %26 = vector.load %arg1[%c0_22, %c24, %c0_23] : memref<2x96x128xf32, #tpu.memory_space<vmem>>, vector<2x8x128xf32>
    %c0_24 = arith.constant 0 : index
    %c24_25 = arith.constant 24 : index
    %c0_26 = arith.constant 0 : index
    %27 = vector.load %arg2[%c0_24, %c24_25, %c0_26] : memref<1x96x128xf32, #tpu.memory_space<vmem>>, vector<1x8x128xf32>
    %28 = vector.broadcast %27 : vector<1x8x128xf32> to vector<2x8x128xf32>
    %29 = arith.mulf %26, %28 : vector<2x8x128xf32>
    %cst_27 = arith.constant dense<0.000000e+00> : vector<2x8xf32>
    %30 = vector.multi_reduction <add>, %29, %cst_27 [2] : vector<2x8x128xf32> to vector<2x8xf32>
    %cst_28 = arith.constant dense<0.000000e+00> : vector<2xf32>
    %31 = vector.multi_reduction <add>, %30, %cst_28 [1] : vector<2x8xf32> to vector<2xf32>
    %32 = vector.shape_cast %31 : vector<2xf32> to vector<2x1xf32>
    %33 = arith.addf %25, %32 : vector<2x1xf32>
    %c0_29 = arith.constant 0 : index
    %c32 = arith.constant 32 : index
    %c0_30 = arith.constant 0 : index
    %34 = vector.load %arg1[%c0_29, %c32, %c0_30] : memref<2x96x128xf32, #tpu.memory_space<vmem>>, vector<2x8x128xf32>
    %c0_31 = arith.constant 0 : index
    %c32_32 = arith.constant 32 : index
    %c0_33 = arith.constant 0 : index
    %35 = vector.load %arg2[%c0_31, %c32_32, %c0_33] : memref<1x96x128xf32, #tpu.memory_space<vmem>>, vector<1x8x128xf32>
    %36 = vector.broadcast %35 : vector<1x8x128xf32> to vector<2x8x128xf32>
    %37 = arith.mulf %34, %36 : vector<2x8x128xf32>
    %cst_34 = arith.constant dense<0.000000e+00> : vector<2x8xf32>
    %38 = vector.multi_reduction <add>, %37, %cst_34 [2] : vector<2x8x128xf32> to vector<2x8xf32>
    %cst_35 = arith.constant dense<0.000000e+00> : vector<2xf32>
    %39 = vector.multi_reduction <add>, %38, %cst_35 [1] : vector<2x8xf32> to vector<2xf32>
    %40 = vector.shape_cast %39 : vector<2xf32> to vector<2x1xf32>
    %41 = arith.addf %33, %40 : vector<2x1xf32>
    %c0_36 = arith.constant 0 : index
    %c40 = arith.constant 40 : index
    %c0_37 = arith.constant 0 : index
    %42 = vector.load %arg1[%c0_36, %c40, %c0_37] : memref<2x96x128xf32, #tpu.memory_space<vmem>>, vector<2x8x128xf32>
    %c0_38 = arith.constant 0 : index
    %c40_39 = arith.constant 40 : index
    %c0_40 = arith.constant 0 : index
    %43 = vector.load %arg2[%c0_38, %c40_39, %c0_40] : memref<1x96x128xf32, #tpu.memory_space<vmem>>, vector<1x8x128xf32>
    %44 = vector.broadcast %43 : vector<1x8x128xf32> to vector<2x8x128xf32>
    %45 = arith.mulf %42, %44 : vector<2x8x128xf32>
    %cst_41 = arith.constant dense<0.000000e+00> : vector<2x8xf32>
    %46 = vector.multi_reduction <add>, %45, %cst_41 [2] : vector<2x8x128xf32> to vector<2x8xf32>
    %cst_42 = arith.constant dense<0.000000e+00> : vector<2xf32>
    %47 = vector.multi_reduction <add>, %46, %cst_42 [1] : vector<2x8xf32> to vector<2xf32>
    %48 = vector.shape_cast %47 : vector<2xf32> to vector<2x1xf32>
    %49 = arith.addf %41, %48 : vector<2x1xf32>
    %c0_43 = arith.constant 0 : index
    %c48 = arith.constant 48 : index
    %c0_44 = arith.constant 0 : index
    %50 = vector.load %arg1[%c0_43, %c48, %c0_44] : memref<2x96x128xf32, #tpu.memory_space<vmem>>, vector<2x8x128xf32>
    %c0_45 = arith.constant 0 : index
    %c48_46 = arith.constant 48 : index
    %c0_47 = arith.constant 0 : index
    %51 = vector.load %arg2[%c0_45, %c48_46, %c0_47] : memref<1x96x128xf32, #tpu.memory_space<vmem>>, vector<1x8x128xf32>
    %52 = vector.broadcast %51 : vector<1x8x128xf32> to vector<2x8x128xf32>
    %53 = arith.mulf %50, %52 : vector<2x8x128xf32>
    %cst_48 = arith.constant dense<0.000000e+00> : vector<2x8xf32>
    %54 = vector.multi_reduction <add>, %53, %cst_48 [2] : vector<2x8x128xf32> to vector<2x8xf32>
    %cst_49 = arith.constant dense<0.000000e+00> : vector<2xf32>
    %55 = vector.multi_reduction <add>, %54, %cst_49 [1] : vector<2x8xf32> to vector<2xf32>
    %56 = vector.shape_cast %55 : vector<2xf32> to vector<2x1xf32>
    %57 = arith.addf %49, %56 : vector<2x1xf32>
    %c0_50 = arith.constant 0 : index
    %c56 = arith.constant 56 : index
    %c0_51 = arith.constant 0 : index
    %58 = vector.load %arg1[%c0_50, %c56, %c0_51] : memref<2x96x128xf32, #tpu.memory_space<vmem>>, vector<2x8x128xf32>
    %c0_52 = arith.constant 0 : index
    %c56_53 = arith.constant 56 : index
    %c0_54 = arith.constant 0 : index
    %59 = vector.load %arg2[%c0_52, %c56_53, %c0_54] : memref<1x96x128xf32, #tpu.memory_space<vmem>>, vector<1x8x128xf32>
    %60 = vector.broadcast %59 : vector<1x8x128xf32> to vector<2x8x128xf32>
    %61 = arith.mulf %58, %60 : vector<2x8x128xf32>
    %cst_55 = arith.constant dense<0.000000e+00> : vector<2x8xf32>
    %62 = vector.multi_reduction <add>, %61, %cst_55 [2] : vector<2x8x128xf32> to vector<2x8xf32>
    %cst_56 = arith.constant dense<0.000000e+00> : vector<2xf32>
    %63 = vector.multi_reduction <add>, %62, %cst_56 [1] : vector<2x8xf32> to vector<2xf32>
    %64 = vector.shape_cast %63 : vector<2xf32> to vector<2x1xf32>
    %65 = arith.addf %57, %64 : vector<2x1xf32>
    %c0_57 = arith.constant 0 : index
    %c64 = arith.constant 64 : index
    %c0_58 = arith.constant 0 : index
    %66 = vector.load %arg1[%c0_57, %c64, %c0_58] : memref<2x96x128xf32, #tpu.memory_space<vmem>>, vector<2x8x128xf32>
    %c0_59 = arith.constant 0 : index
    %c64_60 = arith.constant 64 : index
    %c0_61 = arith.constant 0 : index
    %67 = vector.load %arg2[%c0_59, %c64_60, %c0_61] : memref<1x96x128xf32, #tpu.memory_space<vmem>>, vector<1x8x128xf32>
    %68 = vector.broadcast %67 : vector<1x8x128xf32> to vector<2x8x128xf32>
    %69 = arith.mulf %66, %68 : vector<2x8x128xf32>
    %cst_62 = arith.constant dense<0.000000e+00> : vector<2x8xf32>
    %70 = vector.multi_reduction <add>, %69, %cst_62 [2] : vector<2x8x128xf32> to vector<2x8xf32>
    %cst_63 = arith.constant dense<0.000000e+00> : vector<2xf32>
    %71 = vector.multi_reduction <add>, %70, %cst_63 [1] : vector<2x8xf32> to vector<2xf32>
    %72 = vector.shape_cast %71 : vector<2xf32> to vector<2x1xf32>
    %73 = arith.addf %65, %72 : vector<2x1xf32>
    %c0_64 = arith.constant 0 : index
    %c72 = arith.constant 72 : index
    %c0_65 = arith.constant 0 : index
    %74 = vector.load %arg1[%c0_64, %c72, %c0_65] : memref<2x96x128xf32, #tpu.memory_space<vmem>>, vector<2x8x128xf32>
    %c0_66 = arith.constant 0 : index
    %c72_67 = arith.constant 72 : index
    %c0_68 = arith.constant 0 : index
    %75 = vector.load %arg2[%c0_66, %c72_67, %c0_68] : memref<1x96x128xf32, #tpu.memory_space<vmem>>, vector<1x8x128xf32>
    %76 = vector.broadcast %75 : vector<1x8x128xf32> to vector<2x8x128xf32>
    %77 = arith.mulf %74, %76 : vector<2x8x128xf32>
    %cst_69 = arith.constant dense<0.000000e+00> : vector<2x8xf32>
    %78 = vector.multi_reduction <add>, %77, %cst_69 [2] : vector<2x8x128xf32> to vector<2x8xf32>
    %cst_70 = arith.constant dense<0.000000e+00> : vector<2xf32>
    %79 = vector.multi_reduction <add>, %78, %cst_70 [1] : vector<2x8xf32> to vector<2xf32>
    %80 = vector.shape_cast %79 : vector<2xf32> to vector<2x1xf32>
    %81 = arith.addf %73, %80 : vector<2x1xf32>
    %c0_71 = arith.constant 0 : index
    %c80 = arith.constant 80 : index
    %c0_72 = arith.constant 0 : index
    %82 = vector.load %arg1[%c0_71, %c80, %c0_72] : memref<2x96x128xf32, #tpu.memory_space<vmem>>, vector<2x8x128xf32>
    %c0_73 = arith.constant 0 : index
    %c80_74 = arith.constant 80 : index
    %c0_75 = arith.constant 0 : index
    %83 = vector.load %arg2[%c0_73, %c80_74, %c0_75] : memref<1x96x128xf32, #tpu.memory_space<vmem>>, vector<1x8x128xf32>
    %84 = vector.broadcast %83 : vector<1x8x128xf32> to vector<2x8x128xf32>
    %85 = arith.mulf %82, %84 : vector<2x8x128xf32>
    %cst_76 = arith.constant dense<0.000000e+00> : vector<2x8xf32>
    %86 = vector.multi_reduction <add>, %85, %cst_76 [2] : vector<2x8x128xf32> to vector<2x8xf32>
    %cst_77 = arith.constant dense<0.000000e+00> : vector<2xf32>
    %87 = vector.multi_reduction <add>, %86, %cst_77 [1] : vector<2x8xf32> to vector<2xf32>
    %88 = vector.shape_cast %87 : vector<2xf32> to vector<2x1xf32>
    %89 = arith.addf %81, %88 : vector<2x1xf32>
    %c0_78 = arith.constant 0 : index
    %c88 = arith.constant 88 : index
    %c0_79 = arith.constant 0 : index
    %90 = vector.load %arg1[%c0_78, %c88, %c0_79] : memref<2x96x128xf32, #tpu.memory_space<vmem>>, vector<2x8x128xf32>
    %c0_80 = arith.constant 0 : index
    %c88_81 = arith.constant 88 : index
    %c0_82 = arith.constant 0 : index
    %91 = vector.load %arg2[%c0_80, %c88_81, %c0_82] : memref<1x96x128xf32, #tpu.memory_space<vmem>>, vector<1x8x128xf32>
    %92 = vector.broadcast %91 : vector<1x8x128xf32> to vector<2x8x128xf32>
    %93 = arith.mulf %90, %92 : vector<2x8x128xf32>
    %cst_83 = arith.constant dense<0.000000e+00> : vector<2x8xf32>
    %94 = vector.multi_reduction <add>, %93, %cst_83 [2] : vector<2x8x128xf32> to vector<2x8xf32>
    %cst_84 = arith.constant dense<0.000000e+00> : vector<2xf32>
    %95 = vector.multi_reduction <add>, %94, %cst_84 [1] : vector<2x8xf32> to vector<2xf32>
    %96 = vector.shape_cast %95 : vector<2xf32> to vector<2x1xf32>
    %97 = arith.addf %89, %96 : vector<2x1xf32>
    %98 = vector.broadcast %0 : f32 to vector<2x1xf32>
    %99 = arith.addf %97, %98 : vector<2x1xf32>
    %cst_85 = arith.constant 0.000000e+00 : f32
    %100 = vector.broadcast %cst_85 : f32 to vector<2x1xf32>
    %101 = arith.maximumf %99, %100 : vector<2x1xf32>
    %c0_86 = arith.constant 0 : index
    %c0_87 = arith.constant 0 : index
    %102 = vector.load %arg4[%c0_86, %c0_87] : memref<2x1xf32, #tpu.memory_space<vmem>>, vector<2x1xf32>
    tpu.vector_store %arg4[%c0_86, %c0_87], %101 {strides = array<i32>} : memref<2x1xf32, #tpu.memory_space<vmem>>, vector<2x1xf32>,
    return
  }
  func.func @transform_0(%arg0: i32) -> (i32, i32, i32) {
    %c0_i32 = arith.constant 0 : i32
    %c0_i32_0 = arith.constant 0 : i32
    %c0_i32_1 = arith.constant 0 : i32
    return %arg0, %c0_i32, %c0_i32_0 : i32, i32, i32
  }
  func.func @transform_1(%arg0: i32) -> (i32, i32, i32) {
    %c0_i32 = arith.constant 0 : i32
    %c0_i32_0 = arith.constant 0 : i32
    %c0_i32_1 = arith.constant 0 : i32
    %c0_i32_2 = arith.constant 0 : i32
    return %c0_i32, %c0_i32_0, %c0_i32_1 : i32, i32, i32
  }
  func.func @transform_2(%arg0: i32) -> i32 {
    %c0_i32 = arith.constant 0 : i32
    %c0_i32_0 = arith.constant 0 : i32
    return %c0_i32 : i32
  }
  func.func @transform_3(%arg0: i32) -> (i32, i32) {
    %c0_i32 = arith.constant 0 : i32
    %c0_i32_0 = arith.constant 0 : i32
    return %arg0, %c0_i32 : i32, i32
  }
}

</mosaic_0001>

<llo_original>
// kernel: model_forward.1
$region0: #{model_forward.1}
  #allocation0 [shape = 'u32[]', space=smem, size = 0x4, offset = 0x4, fixed_abs, tag = 'smem constant byte address 0x4 - core index']
  #allocation1 [shape = 'u32[144,128]{1,0:T(1,128)}', space=vmem, size = 0x12000, scoped, tag = 'internal scratch']
  #allocation2 [shape = 'f32[1]{0:T(128)S(6)}', space=smem, size = 0x200, scoped, tag = 'scoped memory for model_forward.1']
  %s0 = inlined_call_operand.vmem [shape: f32[2,96,128], index: 0, kind: input, shape index: {}]
  %s1 = inlined_call_operand.vmem [shape: f32[1,96,128], index: 1, kind: input, shape index: {}]
  %s2 = inlined_call_operand.<no memory space> [shape: f32[1], index: 2, kind: input, shape index: {}]
  %s3 = inlined_call_operand.vmem [shape: f32[2,1], index: 3, kind: output, shape index: {}]
  %s4 = sld [smem:[#allocation0]]
  $region22: #{model_forward.1} parent=0
    _
  %s6 = ssub.s32 1, %s4
  %s7 = scalar_select 0, %s6, %s4
  %8 = sst [smem:[#allocation2]] %s2
  // Predicated region
  $region2: #{model_forward.1} parent=0 // pred_check
    _
  $region3: #{model_forward.1} parent=0 // pred_check_branch
    %10 = sbr.rel (0) target = $region5
  $region4: #{model_forward.1} parent=0 // pred_region
    _
  $region5: #{model_forward.1} parent=0 // pred_fallthru
    _
  // Predicated region
  $region6: #{model_forward.1} parent=0 // pred_check
    _
  $region7: #{model_forward.1} parent=0 // pred_check_branch
    %12 = sbr.rel (0) target = $region9
  $region8: #{model_forward.1} parent=0 // pred_region
    _
  $region9: #{model_forward.1} parent=0 // pred_fallthru
    _
  // Predicated region
  $region10: #{model_forward.1} parent=0 // pred_check
    _
  $region11: #{model_forward.1} parent=0 // pred_check_branch
    %14 = sbr.rel (0) target = $region13
  $region12: #{model_forward.1} parent=0 // pred_region
    _
  $region13: #{model_forward.1} parent=0 // pred_fallthru
    _
  %s15 = sld [smem:[#allocation2]]
  %v16 = vld [vmem:[%s0] sm:$0xff]
  %v17 = vld [vmem:[%s0 + $0x60] sm:$0xff]
  %v18 = vld [vmem:[%s1] sm:$0xff]
  %v19 = vmul.f32 %v16, %v18
  %v20 = vmul.f32 %v17, %v18
  %21 = vadd.xlane.f32.xlu0 %v19
  %v22 = vpop.xlane.xlu0 %21
  %23 = vadd.xlane.f32.xlu0 %v20
  %v24 = vpop.xlane.xlu0 %23
  %v27 = vlaneseq
  %v28 = vand.u32 %v27, 127
  %v29 = vlaneseq
  %v30 = vshrl.u32 %v29, 7
  %v31 = vsub.s32 %v28, %v30
  %v32 = vrot.slane %v22, %v31
  %v33 = vlaneseq
  %v34 = vshrl.u32 %v33, 7
  %v35 = vsub.s32 %v28, %v34
  %v36 = vrot.slane %v24, %v35
  %vm37 = vcmask 1041409
  %v38 = vsel %vm37, %v36, %v32
  %vm40 = vcmask 58368
  %v41 = vsel %vm40, %v38, 0.0
  %42 = vadd.xlane.f32.xlu0 %v41
  %v43 = vpop.xlane.xlu0 %42
  %v44 = vadd.f32 %v43, 0.0
  %v45 = vld [vmem:[%s0 + $0x8] sm:$0xff]
  %v46 = vld [vmem:[%s0 + $0x68] sm:$0xff]
  %v47 = vld [vmem:[%s1 + $0x8] sm:$0xff]
  %v48 = vmul.f32 %v45, %v47
  %v49 = vmul.f32 %v46, %v47
  %50 = vadd.xlane.f32.xlu0 %v48
  %v51 = vpop.xlane.xlu0 %50
  %52 = vadd.xlane.f32.xlu0 %v49
  %v53 = vpop.xlane.xlu0 %52
  %v56 = vlaneseq
  %v57 = vshrl.u32 %v56, 7
  %v58 = vsub.s32 %v28, %v57
  %v59 = vrot.slane %v51, %v58
  %v60 = vlaneseq
  %v61 = vshrl.u32 %v60, 7
  %v62 = vsub.s32 %v28, %v61
  %v63 = vrot.slane %v53, %v62
  %v64 = vsel %vm37, %v63, %v59
  %v66 = vsel %vm40, %v64, 0.0
  %67 = vadd.xlane.f32.xlu0 %v66
  %v68 = vpop.xlane.xlu0 %67
  %v69 = vadd.f32 %v44, %v68
  %v70 = vld [vmem:[%s0 + $0x10] sm:$0xff]
  %v71 = vld [vmem:[%s0 + $0x70] sm:$0xff]
  %v72 = vld [vmem:[%s1 + $0x10] sm:$0xff]
  %v73 = vmul.f32 %v70, %v72
  %v74 = vmul.f32 %v71, %v72
  %75 = vadd.xlane.f32.xlu0 %v73
  %v76 = vpop.xlane.xlu0 %75
  %77 = vadd.xlane.f32.xlu0 %v74
  %v78 = vpop.xlane.xlu0 %77
  %v81 = vlaneseq
  %v82 = vshrl.u32 %v81, 7
  %v83 = vsub.s32 %v28, %v82
  %v84 = vrot.slane %v76, %v83
  %v85 = vlaneseq
  %v86 = vshrl.u32 %v85, 7
  %v87 = vsub.s32 %v28, %v86
  %v88 = vrot.slane %v78, %v87
  %v89 = vsel %vm37, %v88, %v84
  %v91 = vsel %vm40, %v89, 0.0
  %92 = vadd.xlane.f32.xlu0 %v91
  %v93 = vpop.xlane.xlu0 %92
  %v94 = vadd.f32 %v69, %v93
  %v95 = vld [vmem:[%s0 + $0x18] sm:$0xff]
  %v96 = vld [vmem:[%s0 + $0x78] sm:$0xff]
  %v97 = vld [vmem:[%s1 + $0x18] sm:$0xff]
  %v98 = vmul.f32 %v95, %v97
  %v99 = vmul.f32 %v96, %v97
  %100 = vadd.xlane.f32.xlu0 %v98
  %v101 = vpop.xlane.xlu0 %100
  %102 = vadd.xlane.f32.xlu0 %v99
  %v103 = vpop.xlane.xlu0 %102
  %v106 = vlaneseq
  %v107 = vshrl.u32 %v106, 7
  %v108 = vsub.s32 %v28, %v107
  %v109 = vrot.slane %v101, %v108
  %v110 = vlaneseq
  %v111 = vshrl.u32 %v110, 7
  %v112 = vsub.s32 %v28, %v111
  %v113 = vrot.slane %v103, %v112
  %v114 = vsel %vm37, %v113, %v109
  %v116 = vsel %vm40, %v114, 0.0
  %117 = vadd.xlane.f32.xlu0 %v116
  %v118 = vpop.xlane.xlu0 %117
  %v119 = vadd.f32 %v94, %v118
  %v120 = vld [vmem:[%s0 + $0x20] sm:$0xff]
  %v121 = vld [vmem:[%s0 + $0x80] sm:$0xff]
  %v122 = vld [vmem:[%s1 + $0x20] sm:$0xff]
  %v123 = vmul.f32 %v120, %v122
  %v124 = vmul.f32 %v121, %v122
  %125 = vadd.xlane.f32.xlu0 %v123
  %v126 = vpop.xlane.xlu0 %125
  %127 = vadd.xlane.f32.xlu0 %v124
  %v128 = vpop.xlane.xlu0 %127
  %v131 = vlaneseq
  %v132 = vshrl.u32 %v131, 7
  %v133 = vsub.s32 %v28, %v132
  %v134 = vrot.slane %v126, %v133
  %v135 = vlaneseq
  %v136 = vshrl.u32 %v135, 7
  %v137 = vsub.s32 %v28, %v136
  %v138 = vrot.slane %v128, %v137
  %v139 = vsel %vm37, %v138, %v134
  %v141 = vsel %vm40, %v139, 0.0
  %142 = vadd.xlane.f32.xlu0 %v141
  %v143 = vpop.xlane.xlu0 %142
  %v144 = vadd.f32 %v119, %v143
  %v145 = vld [vmem:[%s0 + $0x28] sm:$0xff]
  %v146 = vld [vmem:[%s0 + $0x88] sm:$0xff]
  %v147 = vld [vmem:[%s1 + $0x28] sm:$0xff]
  %v148 = vmul.f32 %v145, %v147
  %v149 = vmul.f32 %v146, %v147
  %150 = vadd.xlane.f32.xlu0 %v148
  %v151 = vpop.xlane.xlu0 %150
  %152 = vadd.xlane.f32.xlu0 %v149
  %v153 = vpop.xlane.xlu0 %152
  %v156 = vlaneseq
  %v157 = vshrl.u32 %v156, 7
  %v158 = vsub.s32 %v28, %v157
  %v159 = vrot.slane %v151, %v158
  %v160 = vlaneseq
  %v161 = vshrl.u32 %v160, 7
  %v162 = vsub.s32 %v28, %v161
  %v163 = vrot.slane %v153, %v162
  %v164 = vsel %vm37, %v163, %v159
  %v166 = vsel %vm40, %v164, 0.0
  %167 = vadd.xlane.f32.xlu0 %v166
  %v168 = vpop.xlane.xlu0 %167
  %v169 = vadd.f32 %v144, %v168
  %v170 = vld [vmem:[%s0 + $0x30] sm:$0xff]
  %v171 = vld [vmem:[%s0 + $0x90] sm:$0xff]
  %v172 = vld [vmem:[%s1 + $0x30] sm:$0xff]
  %v173 = vmul.f32 %v170, %v172
  %v174 = vmul.f32 %v171, %v172
  %175 = vadd.xlane.f32.xlu0 %v173
  %v176 = vpop.xlane.xlu0 %175
  %177 = vadd.xlane.f32.xlu0 %v174
  %v178 = vpop.xlane.xlu0 %177
  %v181 = vlaneseq
  %v182 = vshrl.u32 %v181, 7
  %v183 = vsub.s32 %v28, %v182
  %v184 = vrot.slane %v176, %v183
  %v185 = vlaneseq
  %v186 = vshrl.u32 %v185, 7
  %v187 = vsub.s32 %v28, %v186
  %v188 = vrot.slane %v178, %v187
  %v189 = vsel %vm37, %v188, %v184
  %v191 = vsel %vm40, %v189, 0.0
  %192 = vadd.xlane.f32.xlu0 %v191
  %v193 = vpop.xlane.xlu0 %192
  %v194 = vadd.f32 %v169, %v193
  %v195 = vld [vmem:[%s0 + $0x38] sm:$0xff]
  %v196 = vld [vmem:[%s0 + $0x98] sm:$0xff]
  %v197 = vld [vmem:[%s1 + $0x38] sm:$0xff]
  %v198 = vmul.f32 %v195, %v197
  %v199 = vmul.f32 %v196, %v197
  %200 = vadd.xlane.f32.xlu0 %v198
  %v201 = vpop.xlane.xlu0 %200
  %202 = vadd.xlane.f32.xlu0 %v199
  %v203 = vpop.xlane.xlu0 %202
  %v206 = vlaneseq
  %v207 = vshrl.u32 %v206, 7
  %v208 = vsub.s32 %v28, %v207
  %v209 = vrot.slane %v201, %v208
  %v210 = vlaneseq
  %v211 = vshrl.u32 %v210, 7
  %v212 = vsub.s32 %v28, %v211
  %v213 = vrot.slane %v203, %v212
  %v214 = vsel %vm37, %v213, %v209
  %v216 = vsel %vm40, %v214, 0.0
  %217 = vadd.xlane.f32.xlu0 %v216
  %v218 = vpop.xlane.xlu0 %217
  %v219 = vadd.f32 %v194, %v218
  %v220 = vld [vmem:[%s0 + $0x40] sm:$0xff]
  %v221 = vld [vmem:[%s0 + $0xa0] sm:$0xff]
  %v222 = vld [vmem:[%s1 + $0x40] sm:$0xff]
  %v223 = vmul.f32 %v220, %v222
  %v224 = vmul.f32 %v221, %v222
  %225 = vadd.xlane.f32.xlu0 %v223
  %v226 = vpop.xlane.xlu0 %225
  %227 = vadd.xlane.f32.xlu0 %v224
  %v228 = vpop.xlane.xlu0 %227
  %v231 = vlaneseq
  %v232 = vshrl.u32 %v231, 7
  %v233 = vsub.s32 %v28, %v232
  %v234 = vrot.slane %v226, %v233
  %v235 = vlaneseq
  %v236 = vshrl.u32 %v235, 7
  %v237 = vsub.s32 %v28, %v236
  %v238 = vrot.slane %v228, %v237
  %v239 = vsel %vm37, %v238, %v234
  %v241 = vsel %vm40, %v239, 0.0
  %242 = vadd.xlane.f32.xlu0 %v241
  %v243 = vpop.xlane.xlu0 %242
  %v244 = vadd.f32 %v219, %v243
  %v245 = vld [vmem:[%s0 + $0x48] sm:$0xff]
  %v246 = vld [vmem:[%s0 + $0xa8] sm:$0xff]
  %v247 = vld [vmem:[%s1 + $0x48] sm:$0xff]
  %v248 = vmul.f32 %v245, %v247
  %v249 = vmul.f32 %v246, %v247
  %250 = vadd.xlane.f32.xlu0 %v248
  %v251 = vpop.xlane.xlu0 %250
  %252 = vadd.xlane.f32.xlu0 %v249
  %v253 = vpop.xlane.xlu0 %252
  %v256 = vlaneseq
  %v257 = vshrl.u32 %v256, 7
  %v258 = vsub.s32 %v28, %v257
  %v259 = vrot.slane %v251, %v258
  %v260 = vlaneseq
  %v261 = vshrl.u32 %v260, 7
  %v262 = vsub.s32 %v28, %v261
  %v263 = vrot.slane %v253, %v262
  %v264 = vsel %vm37, %v263, %v259
  %v266 = vsel %vm40, %v264, 0.0
  %267 = vadd.xlane.f32.xlu0 %v266
  %v268 = vpop.xlane.xlu0 %267
  %v269 = vadd.f32 %v244, %v268
  %v270 = vld [vmem:[%s0 + $0x50] sm:$0xff]
  %v271 = vld [vmem:[%s0 + $0xb0] sm:$0xff]
  %v272 = vld [vmem:[%s1 + $0x50] sm:$0xff]
  %v273 = vmul.f32 %v270, %v272
  %v274 = vmul.f32 %v271, %v272
  %275 = vadd.xlane.f32.xlu0 %v273
  %v276 = vpop.xlane.xlu0 %275
  %277 = vadd.xlane.f32.xlu0 %v274
  %v278 = vpop.xlane.xlu0 %277
  %v281 = vlaneseq
  %v282 = vshrl.u32 %v281, 7
  %v283 = vsub.s32 %v28, %v282
  %v284 = vrot.slane %v276, %v283
  %v285 = vlaneseq
  %v286 = vshrl.u32 %v285, 7
  %v287 = vsub.s32 %v28, %v286
  %v288 = vrot.slane %v278, %v287
  %v289 = vsel %vm37, %v288, %v284
  %v291 = vsel %vm40, %v289, 0.0
  %292 = vadd.xlane.f32.xlu0 %v291
  %v293 = vpop.xlane.xlu0 %292
  %v294 = vadd.f32 %v269, %v293
  %v295 = vld [vmem:[%s0 + $0x58] sm:$0xff]
  %v296 = vld [vmem:[%s0 + $0xb8] sm:$0xff]
  %v297 = vld [vmem:[%s1 + $0x58] sm:$0xff]
  %v298 = vmul.f32 %v295, %v297
  %v299 = vmul.f32 %v296, %v297
  %300 = vadd.xlane.f32.xlu0 %v298
  %v301 = vpop.xlane.xlu0 %300
  %302 = vadd.xlane.f32.xlu0 %v299
  %v303 = vpop.xlane.xlu0 %302
  %v306 = vlaneseq
  %v307 = vshrl.u32 %v306, 7
  %v308 = vsub.s32 %v28, %v307
  %v309 = vrot.slane %v301, %v308
  %v310 = vlaneseq
  %v311 = vshrl.u32 %v310, 7
  %v312 = vsub.s32 %v28, %v311
  %v313 = vrot.slane %v303, %v312
  %v314 = vsel %vm37, %v313, %v309
  %v316 = vsel %vm40, %v314, 0.0
  %317 = vadd.xlane.f32.xlu0 %v316
  %v318 = vpop.xlane.xlu0 %317
  %v319 = vadd.f32 %v294, %v318
  %v320 = vstv %s15
  %v321 = vadd.f32 %v319, %v320
  %v322 = vmax.f32 %v321, 0.0
  %vm323 = vcmask 1024
  %324 = vst.msk [vmem:[%s3] sm:$0x3] %vm323, %v322
  // Predicated region
  $region14: #{model_forward.1} parent=0 // pred_check
    _
  $region15: #{model_forward.1} parent=0 // pred_check_branch
    %326 = sbr.rel (0) target = $region17
  $region16: #{model_forward.1} parent=0 // pred_region
    _
  $region17: #{model_forward.1} parent=0 // pred_fallthru
    _
  // Predicated region
  $region18: #{model_forward.1} parent=0 // pred_check
    _
  $region19: #{model_forward.1} parent=0 // pred_check_branch
    %328 = sbr.rel (0) target = $region21
  $region20: #{model_forward.1} parent=0 // pred_region
    _
  $region21: #{model_forward.1} parent=0 // pred_fallthru
    _

</llo_original>
